<compile_context>
chip_gen: v6e
topology: v6e:2x2x1
jax: 0.10.0
libtpu: 0.0.40
codegen_flags: <defaults>
</compile_context>

<pallas_src>
import functools

import jax
import jax.numpy as jnp
from jax.experimental import pallas as pl
from jax.experimental.pallas import tpu as pltpu


def _causal_conv_kernel(x_ref, w_ref, b_ref, o_ref, halo_ref, acc_ref, *,
                        kernel_size, dilation, pad, tile_l, compute_dtype):
    """One (batch, L-tile) grid step.

    x_ref   : (1, C_in, TL)     current (unpadded) input tile
    w_ref   : (K, C_out, C_in)  conv weight, tap-major (already in compute dtype)
    b_ref   : (C_out, 1)        bias (f32)
    o_ref   : (1, C_out, TL)    output tile
    halo_ref: (C_in, pad)       scratch carrying x[:, t0-pad : t0] across L tiles
    acc_ref : (C_out, TL)       f32 scratch accumulator
    """
    l = pl.program_id(1)

    if pad > 0:
        # First L tile of every batch row: the causal left pad is all zeros.
        @pl.when(l == 0)
        def _():
            halo_ref[...] = jnp.zeros_like(halo_ref)

        # (C_in, pad + TL) window:  [ x[t0-pad : t0] | x[t0 : t0+TL] ]
        full = jnp.concatenate([halo_ref[...], x_ref[0]], axis=-1)
    else:
        full = x_ref[0]

    full_c = full if compute_dtype is None else full.astype(compute_dtype)

    # K MXU matmuls accumulated in f32 in VMEM scratch.
    for k in range(kernel_size):
        xk = full_c[:, k * dilation: k * dilation + tile_l]        # (C_in, TL)
        tap = jnp.dot(w_ref[k], xk, preferred_element_type=jnp.float32)
        if k == 0:
            acc_ref[...] = tap
        else:
            acc_ref[...] += tap

    o_ref[0] = (acc_ref[...] + b_ref[...]).astype(o_ref.dtype)

    if pad > 0:
        # Carry the last `pad` columns forward for the next L tile of this row.
        halo_ref[...] = full[:, tile_l: tile_l + pad]


def _choose_tile_l(L, target=512):
    """Pick a sequence tile: full L if small, else a multiple of 128 <= target."""
    if L <= target:
        return L
    for tl in range(target, 127, -128):
        if L % tl == 0:
            return tl
    return target  # caller right-pads L up to a multiple of `target`


def causal_conv1d(x, weight, bias, *, dilation, A=False, tile_l=None,
                  compute_dtype=None):
    """x: (B, C_in, L), weight: (C_out, C_in, K), bias: (C_out,) -> (B, C_out, L)."""
    B, C_in, L = x.shape
    C_out, _, K = weight.shape
    pad = (K - 1) * dilation + (1 if A else 0)

    TL = _choose_tile_l(L) if tile_l is None else tile_l
    n_l = pl.cdiv(L, TL)
    L_full = n_l * TL
    # Right-pad L only if the chosen tile doesn't divide it (extra columns are
    # computed and trimmed; causality means they never feed valid outputs).
    x_in = x if L_full == L else jnp.pad(x, ((0, 0), (0, 0), (0, L_full - L)))

    w_t = jnp.transpose(weight, (2, 0, 1))                  # (K, C_out, C_in), tiny
    if compute_dtype is not None:
        w_t = w_t.astype(compute_dtype)
    b_2d = bias.astype(jnp.float32).reshape(C_out, 1)

    kernel = functools.partial(
        _causal_conv_kernel, kernel_size=K, dilation=dilation, pad=pad,
        tile_l=TL, compute_dtype=compute_dtype)

    out = pl.pallas_call(
        kernel,
        out_shape=jax.ShapeDtypeStruct((B, C_out, L_full), x.dtype),
        grid_spec=pltpu.PrefetchScalarGridSpec(
            num_scalar_prefetch=0,
            grid=(B, n_l),
            in_specs=[
                pl.BlockSpec((1, C_in, TL), lambda b, l: (b, 0, l)),
                pl.BlockSpec((K, C_out, C_in), lambda b, l: (0, 0, 0)),
                pl.BlockSpec((C_out, 1), lambda b, l: (0, 0)),
            ],
            out_specs=pl.BlockSpec((1, C_out, TL), lambda b, l: (b, 0, l)),
            scratch_shapes=[
                pltpu.VMEM((C_in, max(pad, 1)), x.dtype),     # halo carry
                pltpu.VMEM((C_out, TL), jnp.float32),         # f32 accumulator
            ],
        ),
        compiler_params=pltpu.CompilerParams(
            # B is embarrassingly parallel (megacore sharding); the L axis
            # carries the causal halo in scratch, so it must stay sequential.
            dimension_semantics=("parallel", "arbitrary"),
        ),
    )(x_in, w_t, b_2d)

    return out if L_full == L else out[:, :, :L]


def _reference_causal_conv1d(x, weight, bias, *, dilation, A=False):
    """Pure-JAX reference matching the PyTorch module."""
    K = weight.shape[-1]
    pad = (K - 1) * dilation + (1 if A else 0)
    xp = jnp.pad(x, ((0, 0), (0, 0), (pad, 0)))
    out = jax.lax.conv_general_dilated(
        xp, weight,
        window_strides=(1,), padding="VALID",
        rhs_dilation=(dilation,),
        dimension_numbers=("NCH", "OIH", "NCH"),
    )
    out = out + bias[None, :, None]
    if A:
        out = out[:, :, :-1]
    return out


if __name__ == "__main__":
    key = jax.random.PRNGKey(0)
    kx, kw, kb = jax.random.split(key, 3)

    B, C_in, C_out, K, dilation = 2, 4, 6, 3, 2
    # Deterministic param init mimicking nn.Conv1d default (uniform +-1/sqrt(fan_in)).
    bound = 1.0 / jnp.sqrt(jnp.float32(C_in * K))
    weight = jax.random.uniform(kw, (C_out, C_in, K), jnp.float32, -bound, bound)
    bias = jax.random.uniform(kb, (C_out,), jnp.float32, -bound, bound)

    # (L, tile_l): small single-tile case, and a multi-tile case that exercises
    # the VMEM halo carry across sequence tiles.
    for L, tile_l in ((16, None), (384, 128)):
        x = jax.random.normal(kx, (B, C_in, L), dtype=jnp.float32)
        for A in (False, True):
            out = causal_conv1d(x, weight, bias, dilation=dilation, A=A,
                                tile_l=tile_l)
            out = jax.block_until_ready(out)
            ref = _reference_causal_conv1d(x, weight, bias, dilation=dilation, A=A)
            assert out.shape == (B, C_out, L), out.shape
            err = jnp.max(jnp.abs(out - ref))
            assert jnp.allclose(out, ref, atol=1e-4, rtol=1e-4), (
                f"f32 mismatch L={L} A={A}: max err {err}")

    # Optional bf16 MXU compute path (f32 accumulate) — looser tolerance.
    L, tile_l = 384, 128
    x = jax.random.normal(kx, (B, C_in, L), dtype=jnp.float32)
    out = causal_conv1d(x, weight, bias, dilation=dilation, A=True,
                        tile_l=tile_l, compute_dtype=jnp.bfloat16)
    out = jax.block_until_ready(out)
    ref = _reference_causal_conv1d(x, weight, bias, dilation=dilation, A=True)
    assert jnp.allclose(out, ref, atol=5e-2, rtol=5e-2), (
        f"bf16 mismatch: max err {jnp.max(jnp.abs(out - ref))}")

    print("KERNEL_OK")
</pallas_src>

<mosaic_0001>
module attributes {stable_mosaic.version = 11 : i64} {
  func.func @_causal_conv_kernel(%arg0: i32, %arg1: i32, %arg2: memref<1x4x16xf32, #tpu.memory_space<vmem>>, %arg3: memref<3x6x4xf32, #tpu.memory_space<vmem>>, %arg4: memref<6x1xf32, #tpu.memory_space<vmem>>, %arg5: memref<1x6x16xf32, #tpu.memory_space<vmem>>, %arg6: memref<4x4xf32, #tpu.memory_space<vmem>>, %arg7: memref<6x16xf32, #tpu.memory_space<vmem>>) attributes {dimension_semantics = [#tpu.dimension_semantics<parallel>, #tpu.dimension_semantics<arbitrary>], iteration_bounds = array<i64: 2, 1>, scalar_prefetch = 0 : i64, scratch_operands = 2 : i64, tpu.core_type = #tpu.core_type<tc>, window_params = [{transform_indices = @transform_0, window_bounds = array<i64: 1, 4, 16>}, {pipeline_mode = #tpu.pipeline_mode<synchronous>, transform_indices = @transform_1, window_bounds = array<i64: 3, 6, 4>}, {pipeline_mode = #tpu.pipeline_mode<synchronous>, transform_indices = @transform_2, window_bounds = array<i64: 6, 1>}, {transform_indices = @transform_3, window_bounds = array<i64: 1, 6, 16>}]} {
    %c0_i32 = arith.constant 0 : i32
    %0 = arith.cmpi eq, %arg1, %c0_i32 : i32
    %1 = arith.extui %0 : i1 to i32
    %c0_i32_0 = arith.constant 0 : i32
    %2 = arith.cmpi ne, %1, %c0_i32_0 : i32
    scf.if %2 {
      %cst_33 = arith.constant 0.000000e+00 : f32
      %35 = vector.broadcast %cst_33 : f32 to vector<4x4xf32>
      %c0_34 = arith.constant 0 : index
      %c0_35 = arith.constant 0 : index
      %36 = vector.load %arg6[%c0_34, %c0_35] : memref<4x4xf32, #tpu.memory_space<vmem>>, vector<4x4xf32>
      tpu.vector_store %arg6[%c0_34, %c0_35], %35 {strides = array<i32>} : memref<4x4xf32, #tpu.memory_space<vmem>>, vector<4x4xf32>,
    } else {
    }
    %c0 = arith.constant 0 : index
    %c0_1 = arith.constant 0 : index
    %3 = vector.load %arg6[%c0, %c0_1] : memref<4x4xf32, #tpu.memory_space<vmem>>, vector<4x4xf32>
    %c0_2 = arith.constant 0 : index
    %c0_3 = arith.constant 0 : index
    %c0_4 = arith.constant 0 : index
    %4 = vector.load %arg2[%c0_2, %c0_3, %c0_4] : memref<1x4x16xf32, #tpu.memory_space<vmem>>, vector<1x4x16xf32>
    %5 = vector.shape_cast %4 : vector<1x4x16xf32> to vector<4x16xf32>
    %6 = tpu.concatenate %3, %5 in 1 : vector<4x4xf32>, vector<4x16xf32> -> vector<4x20xf32>
    %7 = vector.extract_strided_slice %6 {offsets = [0, 0], sizes = [4, 16], strides = [1, 1]} : vector<4x20xf32> to vector<4x16xf32>
    %c0_5 = arith.constant 0 : index
    %c0_6 = arith.constant 0 : index
    %c0_7 = arith.constant 0 : index
    %8 = vector.load %arg3[%c0_5, %c0_6, %c0_7] : memref<3x6x4xf32, #tpu.memory_space<vmem>>, vector<1x6x4xf32>
    %9 = vector.shape_cast %8 : vector<1x6x4xf32> to vector<6x4xf32>
    %cst = arith.constant dense<0.000000e+00> : vector<6x16xf32>
    %10 = tpu.matmul %9, %7, %cst {dimension_numbers = #tpu.dot_dimension_numbers<[1], [0], [0], [1], [0, 0, 1, 1], [], []>} : vector<6x4xf32>, vector<4x16xf32>, vector<6x16xf32> -> vector<6x16xf32>
    %c0_8 = arith.constant 0 : index
    %c0_9 = arith.constant 0 : index
    %11 = vector.load %arg7[%c0_8, %c0_9] : memref<6x16xf32, #tpu.memory_space<vmem>>, vector<6x16xf32>
    tpu.vector_store %arg7[%c0_8, %c0_9], %10 {strides = array<i32>} : memref<6x16xf32, #tpu.memory_space<vmem>>, vector<6x16xf32>,
    %12 = vector.extract_strided_slice %6 {offsets = [0, 2], sizes = [4, 16], strides = [1, 1]} : vector<4x20xf32> to vector<4x16xf32>
    %c1 = arith.constant 1 : index
    %c0_10 = arith.constant 0 : index
    %c0_11 = arith.constant 0 : index
    %13 = vector.load %arg3[%c1, %c0_10, %c0_11] : memref<3x6x4xf32, #tpu.memory_space<vmem>>, vector<1x6x4xf32>
    %14 = vector.shape_cast %13 : vector<1x6x4xf32> to vector<6x4xf32>
    %cst_12 = arith.constant dense<0.000000e+00> : vector<6x16xf32>
    %15 = tpu.matmul %14, %12, %cst_12 {dimension_numbers = #tpu.dot_dimension_numbers<[1], [0], [0], [1], [0, 0, 1, 1], [], []>} : vector<6x4xf32>, vector<4x16xf32>, vector<6x16xf32> -> vector<6x16xf32>
    %c0_13 = arith.constant 0 : index
    %c0_14 = arith.constant 0 : index
    %16 = vector.load %arg7[%c0_13, %c0_14] : memref<6x16xf32, #tpu.memory_space<vmem>>, vector<6x16xf32>
    %17 = arith.addf %16, %15 : vector<6x16xf32>
    %c0_15 = arith.constant 0 : index
    %c0_16 = arith.constant 0 : index
    %18 = vector.load %arg7[%c0_15, %c0_16] : memref<6x16xf32, #tpu.memory_space<vmem>>, vector<6x16xf32>
    tpu.vector_store %arg7[%c0_15, %c0_16], %17 {strides = array<i32>} : memref<6x16xf32, #tpu.memory_space<vmem>>, vector<6x16xf32>,
    %19 = vector.extract_strided_slice %6 {offsets = [0, 4], sizes = [4, 16], strides = [1, 1]} : vector<4x20xf32> to vector<4x16xf32>
    %c2 = arith.constant 2 : index
    %c0_17 = arith.constant 0 : index
    %c0_18 = arith.constant 0 : index
    %20 = vector.load %arg3[%c2, %c0_17, %c0_18] : memref<3x6x4xf32, #tpu.memory_space<vmem>>, vector<1x6x4xf32>
    %21 = vector.shape_cast %20 : vector<1x6x4xf32> to vector<6x4xf32>
    %cst_19 = arith.constant dense<0.000000e+00> : vector<6x16xf32>
    %22 = tpu.matmul %21, %19, %cst_19 {dimension_numbers = #tpu.dot_dimension_numbers<[1], [0], [0], [1], [0, 0, 1, 1], [], []>} : vector<6x4xf32>, vector<4x16xf32>, vector<6x16xf32> -> vector<6x16xf32>
    %c0_20 = arith.constant 0 : index
    %c0_21 = arith.constant 0 : index
    %23 = vector.load %arg7[%c0_20, %c0_21] : memref<6x16xf32, #tpu.memory_space<vmem>>, vector<6x16xf32>
    %24 = arith.addf %23, %22 : vector<6x16xf32>
    %c0_22 = arith.constant 0 : index
    %c0_23 = arith.constant 0 : index
    %25 = vector.load %arg7[%c0_22, %c0_23] : memref<6x16xf32, #tpu.memory_space<vmem>>, vector<6x16xf32>
    tpu.vector_store %arg7[%c0_22, %c0_23], %24 {strides = array<i32>} : memref<6x16xf32, #tpu.memory_space<vmem>>, vector<6x16xf32>,
    %c0_24 = arith.constant 0 : index
    %c0_25 = arith.constant 0 : index
    %26 = vector.load %arg7[%c0_24, %c0_25] : memref<6x16xf32, #tpu.memory_space<vmem>>, vector<6x16xf32>
    %c0_26 = arith.constant 0 : index
    %c0_27 = arith.constant 0 : index
    %27 = vector.load %arg4[%c0_26, %c0_27] : memref<6x1xf32, #tpu.memory_space<vmem>>, vector<6x1xf32>
    %28 = vector.broadcast %27 : vector<6x1xf32> to vector<6x16xf32>
    %29 = arith.addf %26, %28 : vector<6x16xf32>
    %c0_28 = arith.constant 0 : index
    %c0_29 = arith.constant 0 : index
    %c0_30 = arith.constant 0 : index
    %30 = vector.load %arg5[%c0_28, %c0_29, %c0_30] : memref<1x6x16xf32, #tpu.memory_space<vmem>>, vector<1x6x16xf32>
    %31 = vector.shape_cast %30 : vector<1x6x16xf32> to vector<6x16xf32>
    %32 = vector.shape_cast %29 : vector<6x16xf32> to vector<1x6x16xf32>
    tpu.vector_store %arg5[%c0_28, %c0_29, %c0_30], %32 {strides = array<i32>} : memref<1x6x16xf32, #tpu.memory_space<vmem>>, vector<1x6x16xf32>,
    %33 = vector.extract_strided_slice %6 {offsets = [0, 16], sizes = [4, 4], strides = [1, 1]} : vector<4x20xf32> to vector<4x4xf32>
    %c0_31 = arith.constant 0 : index
    %c0_32 = arith.constant 0 : index
    %34 = vector.load %arg6[%c0_31, %c0_32] : memref<4x4xf32, #tpu.memory_space<vmem>>, vector<4x4xf32>
    tpu.vector_store %arg6[%c0_31, %c0_32], %33 {strides = array<i32>} : memref<4x4xf32, #tpu.memory_space<vmem>>, vector<4x4xf32>,
    return
  }
  func.func @transform_0(%arg0: i32, %arg1: i32) -> (i32, i32, i32) {
    %c0_i32 = arith.constant 0 : i32
    %c0_i32_0 = arith.constant 0 : i32
    return %arg0, %c0_i32, %arg1 : i32, i32, i32
  }
  func.func @transform_1(%arg0: i32, %arg1: i32) -> (i32, i32, i32) {
    %c0_i32 = arith.constant 0 : i32
    %c0_i32_0 = arith.constant 0 : i32
    %c0_i32_1 = arith.constant 0 : i32
    %c0_i32_2 = arith.constant 0 : i32
    return %c0_i32, %c0_i32_0, %c0_i32_1 : i32, i32, i32
  }
  func.func @transform_2(%arg0: i32, %arg1: i32) -> (i32, i32) {
    %c0_i32 = arith.constant 0 : i32
    %c0_i32_0 = arith.constant 0 : i32
    %c0_i32_1 = arith.constant 0 : i32
    return %c0_i32, %c0_i32_0 : i32, i32
  }
  func.func @transform_3(%arg0: i32, %arg1: i32) -> (i32, i32, i32) {
    %c0_i32 = arith.constant 0 : i32
    %c0_i32_0 = arith.constant 0 : i32
    return %arg0, %c0_i32, %arg1 : i32, i32, i32
  }
}

</mosaic_0001>

<llo_original>
// kernel: tpu_custom_call.1
$region0: #{tpu_custom_call.1}
  #allocation0 [shape = 'u32[]', space=smem, size = 0x4, offset = 0x4, fixed_abs, tag = 'smem constant byte address 0x4 - core index']
  #allocation1 [shape = 'u32[144,128]{1,0:T(1,128)}', space=vmem, size = 0x12000, scoped, tag = 'internal scratch']
  #allocation2 [shape = 'f32[4,4]{1,0:T(4,128)}', space=vmem, size = 0x800, scoped, tag = 'scratch operand']
  #allocation3 [shape = 'f32[6,16]{1,0:T(8,128)}', space=vmem, size = 0x1000, scoped, tag = 'scratch operand']
  %s0 = inlined_call_operand.vmem [shape: f32[2,4,16], index: 0, kind: input, shape index: {}]
  %s1 = inlined_call_operand.vmem [shape: f32[3,6,4], index: 1, kind: input, shape index: {}]
  %s2 = inlined_call_operand.vmem [shape: f32[6,1], index: 2, kind: input, shape index: {}]
  %s3 = inlined_call_operand.vmem [shape: f32[2,6,16], index: 3, kind: output, shape index: {}]
  %s4 = sld [smem:[#allocation0]]
  $region49: #{tpu_custom_call.1} parent=0
    _
  %s6 = ssub.s32 1, %s4
  %s7 = scalar_select 0, %s6, %s4
  loop: start=0, step=1, limit=4
  $region2: #{tpu_custom_call.1} parent=0 // loop_pre_header
    _
  $region3: #{tpu_custom_call.1} parent=0 // loop_header
    %s9 = sphi 0, %s13
    %p10 = scmp.ge.s32.totalorder %s9, 4
    %s16 = sphi 0, %s28
    %s17 = sphi 0, %s24
    %s18 = sphi 0, %s16
    %s19 = sphi 0, %s17
    %s20 = sphi 0, %s18
    %s21 = sphi 0, %s19
    %s33 = sphi 0, %s35
    %s36 = sphi 0, %s33
    %s37 = sphi 0, %s36
    %s53 = sphi 0, %s37
    %s57 = sphi 0, %s57
    %s59 = sphi 0, %s57
    %s60 = sphi 0, %s59
    %s74 = sphi 0, %s60
    %s78 = sphi 0, %s78
    %s80 = sphi 0, %s78
    %s81 = sphi 0, %s80
    %s95 = sphi 0, %s81
    %s103 = sphi 0, %s105
    %s106 = sphi 0, %s103
    %s107 = sphi 0, %s106
    %s123 = sphi 0, %s107
  $region4: #{tpu_custom_call.1} parent=0 // loop_header_branch
    %12 = sbr.rel (%p10) target = $region8
  $region5: #{tpu_custom_call.1} parent=0 // loop_body
    %s14 = ssub.s32 %s9, 1
    %s15 = ssub.s32 %s9, 2
    %s22 = sadd.s32 1, %s17
    %p23 = scmp.ge.s32.totalorder %s22, 1
    %s24 = scalar_select %p23, 0, %s22
    %s25 = sadd.s32 1, %s16
    %s26 = scalar_select %p23, %s25, %s16
    %p27 = scmp.ge.s32.totalorder %s26, 2
    %s28 = scalar_select %p27, 0, %s26
    %s29 = ssub.s32 %s16, %s28
    %s30 = ssub.s32 %s17, %s24
    %s31 = sor.u32 %s29, %s30
    %p32 = scmp.eq.s32.totalorder %s31, 0
    %s34 = sadd.s32 %s33, 1
    %s35 = scalar_select %p32, %s33, %s34
    %p38 = pneg %p32
    %p39 = scmp.eq.s32.totalorder %s9, 1
    %p40 = por %p38, %p39
    %p41 = scmp.ne.s32.totalorder %s33, %s36
    %p42 = scmp.eq.s32.totalorder %s9, 0
    %p43 = por %p41, %p42
    %p44 = scmp.ne.s32.totalorder %s33, %s36
    %p45 = scmp.eq.s32.totalorder %s14, 1
    %p46 = por %p44, %p45
    %p47 = scmp.ne.s32.totalorder %s36, %s37
    %p48 = scmp.eq.s32.totalorder %s14, 0
    %p49 = por %p47, %p48
    %p50 = scmp.ne.s32.totalorder %s36, %s37
    %p51 = scmp.eq.s32.totalorder %s15, 1
    %p52 = por %p50, %p51
    %p54 = scmp.ne.s32.totalorder %s37, %s53
    %p55 = scmp.eq.s32.totalorder %s15, 0
    %p56 = por %p54, %p55
    %s58 = sadd.s32 %s57, 1
    %p61 = scmp.eq.s32.totalorder %s9, 1
    %p62 = scmp.ne.s32.totalorder %s57, %s59
    %p63 = scmp.eq.s32.totalorder %s9, 0
    %p64 = por %p62, %p63
    %p65 = scmp.ne.s32.totalorder %s57, %s59
    %p66 = scmp.eq.s32.totalorder %s14, 1
    %p67 = por %p65, %p66
    %p68 = scmp.ne.s32.totalorder %s59, %s60
    %p69 = scmp.eq.s32.totalorder %s14, 0
    %p70 = por %p68, %p69
    %p71 = scmp.ne.s32.totalorder %s59, %s60
    %p72 = scmp.eq.s32.totalorder %s15, 1
    %p73 = por %p71, %p72
    %p75 = scmp.ne.s32.totalorder %s60, %s74
    %p76 = scmp.eq.s32.totalorder %s15, 0
    %p77 = por %p75, %p76
    %s79 = sadd.s32 %s78, 1
    %p82 = scmp.eq.s32.totalorder %s9, 1
    %p83 = scmp.ne.s32.totalorder %s78, %s80
    %p84 = scmp.eq.s32.totalorder %s9, 0
    %p85 = por %p83, %p84
    %p86 = scmp.ne.s32.totalorder %s78, %s80
    %p87 = scmp.eq.s32.totalorder %s14, 1
    %p88 = por %p86, %p87
    %p89 = scmp.ne.s32.totalorder %s80, %s81
    %p90 = scmp.eq.s32.totalorder %s14, 0
    %p91 = por %p89, %p90
    %p92 = scmp.ne.s32.totalorder %s80, %s81
    %p93 = scmp.eq.s32.totalorder %s15, 1
    %p94 = por %p92, %p93
    %p96 = scmp.ne.s32.totalorder %s81, %s95
    %p97 = scmp.eq.s32.totalorder %s15, 0
    %p98 = por %p96, %p97
    %s99 = ssub.s32 %s16, %s28
    %s100 = ssub.s32 %s17, %s24
    %s101 = sor.u32 %s99, %s100
    %p102 = scmp.eq.s32.totalorder %s101, 0
    %s104 = sadd.s32 %s103, 1
    %s105 = scalar_select %p102, %s103, %s104
    %p108 = pneg %p102
    %p109 = scmp.eq.s32.totalorder %s9, 1
    %p110 = por %p108, %p109
    %p111 = scmp.ne.s32.totalorder %s103, %s106
    %p112 = scmp.eq.s32.totalorder %s9, 0
    %p113 = por %p111, %p112
    %p114 = scmp.ne.s32.totalorder %s103, %s106
    %p115 = scmp.eq.s32.totalorder %s14, 1
    %p116 = por %p114, %p115
    %p117 = scmp.ne.s32.totalorder %s106, %s107
    %p118 = scmp.eq.s32.totalorder %s14, 0
    %p119 = por %p117, %p118
    %p120 = scmp.ne.s32.totalorder %s106, %s107
    %p121 = scmp.eq.s32.totalorder %s15, 1
    %p122 = por %p120, %p121
    %p124 = scmp.ne.s32.totalorder %s107, %s123
    %p125 = scmp.eq.s32.totalorder %s15, 0
    %p126 = por %p124, %p125
    %p127 = scmp.le.s32.totalorder 1, %s9
    %p128 = scmp.lt.s32.totalorder %s9, 3
    %p129 = pnand %p127, %p128
    %p130 = pneg %p129
    // Predicated region
    $region9: #{tpu_custom_call.1} parent=5 // pred_check
      _
    $region10: #{tpu_custom_call.1} parent=5 // pred_check_branch
      %132 = sbr.rel (%p129) target = $region12
    $region11: #{tpu_custom_call.1} parent=5 // pred_region
      %s133 = ssub.s32 %s9, 1
      // Predicated region
      $region13: #{tpu_custom_call.1} parent=11 // pred_check
        %p134 = pneg %p70
      $region14: #{tpu_custom_call.1} parent=11 // pred_check_branch
        %136 = sbr.rel (%p134) target = $region16
      $region15: #{tpu_custom_call.1} parent=11 // pred_region
        _
      $region16: #{tpu_custom_call.1} parent=11 // pred_fallthru
        _
      // Predicated region
      $region17: #{tpu_custom_call.1} parent=11 // pred_check
        %p137 = pneg %p91
      $region18: #{tpu_custom_call.1} parent=11 // pred_check_branch
        %139 = sbr.rel (%p137) target = $region20
      $region19: #{tpu_custom_call.1} parent=11 // pred_region
        _
      $region20: #{tpu_custom_call.1} parent=11 // pred_fallthru
        _
    $region12: #{tpu_custom_call.1} parent=5 // pred_fallthru
      _
    %p140 = scmp.lt.s32.totalorder %s9, 2
    // Predicated region
    $region21: #{tpu_custom_call.1} parent=5 // pred_check
      %p141 = pneg %p140
    $region22: #{tpu_custom_call.1} parent=5 // pred_check_branch
      %143 = sbr.rel (%p141) target = $region24
    $region23: #{tpu_custom_call.1} parent=5 // pred_region
      // Predicated region
      $region25: #{tpu_custom_call.1} parent=23 // pred_check
        %p144 = pneg %p43
      $region26: #{tpu_custom_call.1} parent=23 // pred_check_branch
        %146 = sbr.rel (%p144) target = $region28
      $region27: #{tpu_custom_call.1} parent=23 // pred_region
        %p147 = scmp.lt.s32.totalorder %s16, 1
        %s148 = scalar_select %p147, %s16, 1
        %p149 = scmp.lt.s32.totalorder %s17, 0
        %s150 = scalar_select %p149, %s17, 0
        %s151 = sadd.s32 %s150, %s148
        %s152 = smul.addr %s151, 4
        %s153 = scalar_lea.vmem %s0, %s152
      $region28: #{tpu_custom_call.1} parent=23 // pred_fallthru
        _
    $region24: #{tpu_custom_call.1} parent=5 // pred_fallthru
      _
    %p154 = scmp.le.s32.totalorder 1, %s9
    %p155 = scmp.lt.s32.totalorder %s9, 3
    %p156 = pnand %p154, %p155
    %p157 = pneg %p156
    // Predicated region
    $region29: #{tpu_custom_call.1} parent=5 // pred_check
      _
    $region30: #{tpu_custom_call.1} parent=5 // pred_check_branch
      %159 = sbr.rel (%p156) target = $region32
    $region31: #{tpu_custom_call.1} parent=5 // pred_region
      %s160 = ssub.s32 %s9, 1
      %p161 = scmp.lt.s32.totalorder %s18, 1
      %s162 = scalar_select %p161, %s18, 1
      %p163 = scmp.lt.s32.totalorder %s19, 0
      %s164 = scalar_select %p163, %s19, 0
      %s165 = sadd.s32 %s164, %s162
      %s166 = smul.addr %s165, 4
      %s167 = scalar_lea.vmem %s0, %s166
      %p168 = pneg %p49
      %p169 = pneg %p46
      %p170 = pneg %p70
      %p171 = pneg %p67
      %p172 = pneg %p91
      %p173 = pneg %p88
      %p174 = pneg %p119
      %p175 = pneg %p116
      %p176 = scmp.lt.s32.totalorder %s18, 1
      %s177 = scalar_select %p176, %s18, 1
      %p178 = scmp.lt.s32.totalorder %s19, 0
      %s179 = scalar_select %p178, %s19, 0
      %s180 = sadd.s32 %s179, %s177
      %s181 = smul.addr %s180, 8
      %s182 = scalar_lea.vmem %s3, %s181
      %p183 = scmp.lt.s32.totalorder %s18, 1
      %s184 = scalar_select %p183, %s18, 1
      %p185 = scmp.lt.s32.totalorder %s19, 0
      %s186 = scalar_select %p185, %s19, 0
      %s187 = sadd.s32 %s186, %s184
      %s188 = smul.addr %s187, 4
      %s189 = scalar_lea.vmem %s0, %s188
      %p190 = scmp.lt.s32.totalorder %s18, 1
      %s191 = scalar_select %p190, %s18, 1
      %p192 = scmp.lt.s32.totalorder %s19, 0
      %s193 = scalar_select %p192, %s19, 0
      %s194 = sadd.s32 %s193, %s191
      %s195 = smul.addr %s194, 8
      %s196 = scalar_lea.vmem %s3, %s195
      %p197 = scmp.eq.s32.totalorder %s19, 0
      // Predicated region
      $region33: #{tpu_custom_call.1} parent=31 // pred_check
        %p198 = pneg %p197
      $region34: #{tpu_custom_call.1} parent=31 // pred_check_branch
        %200 = sbr.rel (%p198) target = $region36
      $region35: #{tpu_custom_call.1} parent=31 // pred_region
        %vm201 = vcmask 27648
        %202 = vst.msk [vmem:[#allocation2] sm:$0xf] %vm201, 0.0
      $region36: #{tpu_custom_call.1} parent=31 // pred_fallthru
        _
      %v203 = vld [vmem:[#allocation2] sm:$0xf]
      %v204 = vld [vmem:[%s189] sm:$0xf]
      %206 = vrot.lane.b32.xlu0 %v204, 4
      %v207 = vpop.permute.xlu0 %206
      %vm209 = vcmask 31744
      %v210 = vsel %vm209, %v203, %v207
      %v211 = vld [vmem:[%s1] sm:$0x3f]
      %v213 = vsel %vm209, %v211, 0
      %vm215 = vcmask 1043456
      %v217 = vsel %vm215, %v210, 0
      %219 = vmatprep.subr.mxu0 0.0
      %220 = vmatpush1.msra.mxu0 0.0
      %221 = vmatprep.subr.mxu0 0.0
      %222 = vmatpush1.msra.mxu0 0.0
      %223 = vmatprep.subr.mxu0 0.0
      %224 = vmatpush1.msra.mxu0 0.0
      %225 = vmatprep.subr.mxu0 0.0
      %226 = vmatpush1.msra.mxu0 0.0
      %227 = vmatprep.subr.mxu0 0.0
      %228 = vmatpush1.msra.mxu0 0.0
      %229 = vmatprep.subr.mxu0 0.0
      %230 = vmatpush1.msra.mxu0 0.0
      %231 = vmatprep.subr.mxu0 0.0
      %232 = vmatpush1.msra.mxu0 0.0
      %233 = vmatprep.subr.mxu0 0.0
      %234 = vmatpush1.msra.mxu0 0.0
      %235 = vmatprep.subr.mxu0 0.0
      %236 = vmatpush1.msra.mxu0 0.0
      %237 = vmatprep.subr.mxu0 0.0
      %238 = vmatpush1.msra.mxu0 0.0
      %239 = vmatprep.subr.mxu0 0.0
      %240 = vmatpush1.msra.mxu0 0.0
      %241 = vmatprep.subr.mxu0 0.0
      %242 = vmatpush1.msra.mxu0 0.0
      %243 = vmatprep.subr.mxu0 0.0
      %244 = vmatpush1.msra.mxu0 0.0
      %245 = vmatprep.subr.mxu0 0.0
      %246 = vmatpush1.msra.mxu0 0.0
      %247 = vmatprep.subr.mxu0 0.0
      %248 = vmatpush1.msra.mxu0 0.0
      %249 = vmatprep.subr.mxu0 0.0
      %250 = vmatpush1.msra.mxu0 %v217
      %251 = vmatprep.subr.mxu0 0.0
      %252 = vmatpush2.msra.mxu0 0.0
      %253 = vmatprep.subr.mxu0 0.0
      %254 = vmatpush2.msra.mxu0 0.0
      %255 = vmatprep.subr.mxu0 0.0
      %256 = vmatpush2.msra.mxu0 0.0
      %257 = vmatprep.subr.mxu0 0.0
      %258 = vmatpush2.msra.mxu0 0.0
      %259 = vmatprep.subr.mxu0 0.0
      %260 = vmatpush2.msra.mxu0 0.0
      %261 = vmatprep.subr.mxu0 0.0
      %262 = vmatpush2.msra.mxu0 0.0
      %263 = vmatprep.subr.mxu0 0.0
      %264 = vmatpush2.msra.mxu0 0.0
      %265 = vmatprep.subr.mxu0 0.0
      %266 = vmatpush2.msra.mxu0 0.0
      %267 = vmatprep.subr.mxu0 0.0
      %268 = vmatpush2.msra.mxu0 0.0
      %269 = vmatprep.subr.mxu0 0.0
      %270 = vmatpush2.msra.mxu0 0.0
      %271 = vmatprep.subr.mxu0 0.0
      %272 = vmatpush2.msra.mxu0 0.0
      %273 = vmatprep.subr.mxu0 0.0
      %274 = vmatpush2.msra.mxu0 0.0
      %275 = vmatprep.subr.mxu0 0.0
      %276 = vmatpush2.msra.mxu0 0.0
      %277 = vmatprep.subr.mxu0 0.0
      %278 = vmatpush2.msra.mxu0 0.0
      %279 = vmatprep.subr.mxu0 0.0
      %280 = vmatpush2.msra.mxu0 0.0
      %281 = vmatprep.subr.mxu0 0.0
      %282 = vmatpush2.msra.mxu0 0.0
      %283 = vmatprep.mubr.f32.mxu0 0.0
      %284 = vmatmul.mubr.f32.gmra.mxu0 %v213
      %v285 = vpop.f32.mrf.mxu0
      %v286 = vadd.f32 0.0, %v285
      %v287 = vpop.f32.mrf.mxu0
      %288 = vdwg.mxu0
      %vm289 = vcmask 128000
      %290 = vst.msk [vmem:[#allocation3] sm:$0x3f] %vm289, %v286
      %s291 = scalar_lea.vmem %s1, 8
      %v292 = vld [vmem:[%s291] sm:$0x3f]
      %293 = vrot.lane.b32.xlu0 %v210, 126
      %v294 = vpop.permute.xlu0 %293
      %v296 = vsel %vm209, %v292, 0
      %v298 = vsel %vm215, %v294, 0
      %300 = vmatprep.subr.mxu0 0.0
      %301 = vmatpush1.msra.mxu0 0.0
      %302 = vmatprep.subr.mxu0 0.0
      %303 = vmatpush1.msra.mxu0 0.0
      %304 = vmatprep.subr.mxu0 0.0
      %305 = vmatpush1.msra.mxu0 0.0
      %306 = vmatprep.subr.mxu0 0.0
      %307 = vmatpush1.msra.mxu0 0.0
      %308 = vmatprep.subr.mxu0 0.0
      %309 = vmatpush1.msra.mxu0 0.0
      %310 = vmatprep.subr.mxu0 0.0
      %311 = vmatpush1.msra.mxu0 0.0
      %312 = vmatprep.subr.mxu0 0.0
      %313 = vmatpush1.msra.mxu0 0.0
      %314 = vmatprep.subr.mxu0 0.0
      %315 = vmatpush1.msra.mxu0 0.0
      %316 = vmatprep.subr.mxu0 0.0
      %317 = vmatpush1.msra.mxu0 0.0
      %318 = vmatprep.subr.mxu0 0.0
      %319 = vmatpush1.msra.mxu0 0.0
      %320 = vmatprep.subr.mxu0 0.0
      %321 = vmatpush1.msra.mxu0 0.0
      %322 = vmatprep.subr.mxu0 0.0
      %323 = vmatpush1.msra.mxu0 0.0
      %324 = vmatprep.subr.mxu0 0.0
      %325 = vmatpush1.msra.mxu0 0.0
      %326 = vmatprep.subr.mxu0 0.0
      %327 = vmatpush1.msra.mxu0 0.0
      %328 = vmatprep.subr.mxu0 0.0
      %329 = vmatpush1.msra.mxu0 0.0
      %330 = vmatprep.subr.mxu0 0.0
      %331 = vmatpush1.msra.mxu0 %v298
      %332 = vmatprep.subr.mxu0 0.0
      %333 = vmatpush2.msra.mxu0 0.0
      %334 = vmatprep.subr.mxu0 0.0
      %335 = vmatpush2.msra.mxu0 0.0
      %336 = vmatprep.subr.mxu0 0.0
      %337 = vmatpush2.msra.mxu0 0.0
      %338 = vmatprep.subr.mxu0 0.0
      %339 = vmatpush2.msra.mxu0 0.0
      %340 = vmatprep.subr.mxu0 0.0
      %341 = vmatpush2.msra.mxu0 0.0
      %342 = vmatprep.subr.mxu0 0.0
      %343 = vmatpush2.msra.mxu0 0.0
      %344 = vmatprep.subr.mxu0 0.0
      %345 = vmatpush2.msra.mxu0 0.0
      %346 = vmatprep.subr.mxu0 0.0
      %347 = vmatpush2.msra.mxu0 0.0
      %348 = vmatprep.subr.mxu0 0.0
      %349 = vmatpush2.msra.mxu0 0.0
      %350 = vmatprep.subr.mxu0 0.0
      %351 = vmatpush2.msra.mxu0 0.0
      %352 = vmatprep.subr.mxu0 0.0
      %353 = vmatpush2.msra.mxu0 0.0
      %354 = vmatprep.subr.mxu0 0.0
      %355 = vmatpush2.msra.mxu0 0.0
      %356 = vmatprep.subr.mxu0 0.0
      %357 = vmatpush2.msra.mxu0 0.0
      %358 = vmatprep.subr.mxu0 0.0
      %359 = vmatpush2.msra.mxu0 0.0
      %360 = vmatprep.subr.mxu0 0.0
      %361 = vmatpush2.msra.mxu0 0.0
      %362 = vmatprep.subr.mxu0 0.0
      %363 = vmatpush2.msra.mxu0 0.0
      %364 = vmatprep.mubr.f32.mxu0 0.0
      %365 = vmatmul.mubr.f32.gmra.mxu0 %v296
      %v366 = vpop.f32.mrf.mxu0
      %v367 = vadd.f32 0.0, %v366
      %v368 = vpop.f32.mrf.mxu0
      %369 = vdwg.mxu0
      %v370 = vld [vmem:[#allocation3] sm:$0x3f]
      %v371 = vadd.f32 %v370, %v367
      %372 = vst.msk [vmem:[#allocation3] sm:$0x3f] %vm289, %v371
      %s373 = scalar_lea.vmem %s1, 16
      %v374 = vld [vmem:[%s373] sm:$0x3f]
      %375 = vrot.lane.b32.xlu0 %v210, 124
      %v376 = vpop.permute.xlu0 %375
      %v378 = vsel %vm209, %v374, 0
      %v380 = vsel %vm215, %v376, 0
      %382 = vmatprep.subr.mxu0 0.0
      %383 = vmatpush1.msra.mxu0 0.0
      %384 = vmatprep.subr.mxu0 0.0
      %385 = vmatpush1.msra.mxu0 0.0
      %386 = vmatprep.subr.mxu0 0.0
      %387 = vmatpush1.msra.mxu0 0.0
      %388 = vmatprep.subr.mxu0 0.0
      %389 = vmatpush1.msra.mxu0 0.0
      %390 = vmatprep.subr.mxu0 0.0
      %391 = vmatpush1.msra.mxu0 0.0
      %392 = vmatprep.subr.mxu0 0.0
      %393 = vmatpush1.msra.mxu0 0.0
      %394 = vmatprep.subr.mxu0 0.0
      %395 = vmatpush1.msra.mxu0 0.0
      %396 = vmatprep.subr.mxu0 0.0
      %397 = vmatpush1.msra.mxu0 0.0
      %398 = vmatprep.subr.mxu0 0.0
      %399 = vmatpush1.msra.mxu0 0.0
      %400 = vmatprep.subr.mxu0 0.0
      %401 = vmatpush1.msra.mxu0 0.0
      %402 = vmatprep.subr.mxu0 0.0
      %403 = vmatpush1.msra.mxu0 0.0
      %404 = vmatprep.subr.mxu0 0.0
      %405 = vmatpush1.msra.mxu0 0.0
      %406 = vmatprep.subr.mxu0 0.0
      %407 = vmatpush1.msra.mxu0 0.0
      %408 = vmatprep.subr.mxu0 0.0
      %409 = vmatpush1.msra.mxu0 0.0
      %410 = vmatprep.subr.mxu0 0.0
      %411 = vmatpush1.msra.mxu0 0.0
      %412 = vmatprep.subr.mxu0 0.0
      %413 = vmatpush1.msra.mxu0 %v380
      %414 = vmatprep.subr.mxu0 0.0
      %415 = vmatpush2.msra.mxu0 0.0
      %416 = vmatprep.subr.mxu0 0.0
      %417 = vmatpush2.msra.mxu0 0.0
      %418 = vmatprep.subr.mxu0 0.0
      %419 = vmatpush2.msra.mxu0 0.0
      %420 = vmatprep.subr.mxu0 0.0
      %421 = vmatpush2.msra.mxu0 0.0
      %422 = vmatprep.subr.mxu0 0.0
      %423 = vmatpush2.msra.mxu0 0.0
      %424 = vmatprep.subr.mxu0 0.0
      %425 = vmatpush2.msra.mxu0 0.0
      %426 = vmatprep.subr.mxu0 0.0
      %427 = vmatpush2.msra.mxu0 0.0
      %428 = vmatprep.subr.mxu0 0.0
      %429 = vmatpush2.msra.mxu0 0.0
      %430 = vmatprep.subr.mxu0 0.0
      %431 = vmatpush2.msra.mxu0 0.0
      %432 = vmatprep.subr.mxu0 0.0
      %433 = vmatpush2.msra.mxu0 0.0
      %434 = vmatprep.subr.mxu0 0.0
      %435 = vmatpush2.msra.mxu0 0.0
      %436 = vmatprep.subr.mxu0 0.0
      %437 = vmatpush2.msra.mxu0 0.0
      %438 = vmatprep.subr.mxu0 0.0
      %439 = vmatpush2.msra.mxu0 0.0
      %440 = vmatprep.subr.mxu0 0.0
      %441 = vmatpush2.msra.mxu0 0.0
      %442 = vmatprep.subr.mxu0 0.0
      %443 = vmatpush2.msra.mxu0 0.0
      %444 = vmatprep.subr.mxu0 0.0
      %445 = vmatpush2.msra.mxu0 0.0
      %446 = vmatprep.mubr.f32.mxu0 0.0
      %447 = vmatmul.mubr.f32.gmra.mxu0 %v378
      %v448 = vpop.f32.mrf.mxu0
      %v449 = vadd.f32 0.0, %v448
      %v450 = vpop.f32.mrf.mxu0
      %451 = vdwg.mxu0
      %v452 = vld [vmem:[#allocation3] sm:$0x3f]
      %v453 = vadd.f32 %v452, %v449
      %454 = vst.msk [vmem:[#allocation3] sm:$0x3f] %vm289, %v453
      %v455 = vld [vmem:[#allocation3] sm:$0x3f]
      %v456 = vld [vmem:[%s2] sm:$0x3f]
      %458 = vset.pattern.permute.xlu0 0
      %459 = vperm.xlu0 %458, %v456
      %v460 = vpop.permute.xlu0 %459
      %v462 = vadd.f32 %v455, %v460
      %463 = vst.msk [vmem:[%s196] sm:$0x3f] %vm289, %v462
      %464 = vrot.lane.b32.xlu0 %v210, 112
      %v465 = vpop.permute.xlu0 %464
      %vm467 = vcmask 27648
      %468 = vst.msk [vmem:[#allocation2] sm:$0xf] %vm467, %v465
      %p469 = scmp.lt.s32.totalorder %s18, 1
      %s470 = scalar_select %p469, %s18, 1
      %p471 = scmp.lt.s32.totalorder %s19, 0
      %s472 = scalar_select %p471, %s19, 0
      %s473 = sadd.s32 %s472, %s470
      %s474 = smul.addr %s473, 8
      %s475 = scalar_lea.vmem %s3, %s474
      // Predicated region
      $region37: #{tpu_custom_call.1} parent=31 // pred_check
        %p476 = pneg %p116
      $region38: #{tpu_custom_call.1} parent=31 // pred_check_branch
        %478 = sbr.rel (%p476) target = $region40
      $region39: #{tpu_custom_call.1} parent=31 // pred_region
        _
      $region40: #{tpu_custom_call.1} parent=31 // pred_fallthru
        _
    $region32: #{tpu_custom_call.1} parent=5 // pred_fallthru
      _
    %p479 = scmp.le.s32.totalorder 2, %s9
    // Predicated region
    $region41: #{tpu_custom_call.1} parent=5 // pred_check
      %p480 = pneg %p479
    $region42: #{tpu_custom_call.1} parent=5 // pred_check_branch
      %482 = sbr.rel (%p480) target = $region44
    $region43: #{tpu_custom_call.1} parent=5 // pred_region
      %s483 = ssub.s32 %s9, 2
      // Predicated region
      $region45: #{tpu_custom_call.1} parent=43 // pred_check
        %p484 = pneg %p122
      $region46: #{tpu_custom_call.1} parent=43 // pred_check_branch
        %486 = sbr.rel (%p484) target = $region48
      $region47: #{tpu_custom_call.1} parent=43 // pred_region
        %p487 = scmp.lt.s32.totalorder %s20, 1
        %s488 = scalar_select %p487, %s20, 1
        %p489 = scmp.lt.s32.totalorder %s21, 0
        %s490 = scalar_select %p489, %s21, 0
        %s491 = sadd.s32 %s490, %s488
        %s492 = smul.addr %s491, 8
        %s493 = scalar_lea.vmem %s3, %s492
      $region48: #{tpu_custom_call.1} parent=43 // pred_fallthru
        _
    $region44: #{tpu_custom_call.1} parent=5 // pred_fallthru
      _
  $region6: #{tpu_custom_call.1} parent=0 // loop_footer
    %s13 = sadd.s32 1, %s9
  $region7: #{tpu_custom_call.1} parent=0 // loop_footer_branch
    %8 = sbr.rel target = $region3
  $region8: #{tpu_custom_call.1} parent=0 // loop_exit
    _

</llo_original>
